<compile_context>
chip_gen: v6e
topology: v6e:2x2x1
jax: 0.10.0
libtpu: 0.0.40
codegen_flags: <defaults>
</compile_context>

<pallas_src>
from functools import partial

import jax
import jax.numpy as jnp
from jax import lax
from jax.experimental import pallas as pl
from jax.experimental.pallas import tpu as pltpu


# ----------------------------- kernel helpers --------------------------------

def _fold_lanes(v, channels, reps):
    """(1, channels*reps) -> (1, channels): sum the `reps` lane groups."""
    if reps == 1:
        return v
    acc = v[:, 0:channels]
    for g in range(1, reps):
        acc = acc + v[:, g * channels:(g + 1) * channels]
    return acc


def _tile_lanes(v, reps):
    """(1, channels) -> (1, channels*reps): repeat along the lane axis."""
    if reps == 1:
        return v
    return jnp.concatenate([v] * reps, axis=-1)


def _scale_from_sumsq(sumsq, gamma_f32, channels, reps):
    """Per-channel folded scale s = gamma * Nx + 1, tiled back to lane width."""
    sumsq_c = _fold_lanes(sumsq, channels, reps)              # (1, C)
    gx = jnp.sqrt(sumsq_c)                                    # (1, C)
    mean_g = jnp.mean(gx, axis=-1, keepdims=True)             # (1, 1)
    nx = gx * pl.reciprocal(mean_g + 1e-6, approx=False)      # exact; O(C) work
    return _tile_lanes(gamma_f32 * nx + 1.0, reps)            # (1, lanes)


# ------------------------------- kernels --------------------------------------

def _grn_fused_kernel(gamma_ref, beta_ref, x_ref, o_ref, *, channels, reps):
    """Single pass: reduce + normalize + apply on the resident (rows, lanes) slab."""
    xf = x_ref[0].astype(jnp.float32)                         # (rows, lanes)
    sumsq = jnp.sum(xf * xf, axis=0, keepdims=True)           # (1, lanes)
    scale = _scale_from_sumsq(
        sumsq, gamma_ref[...].astype(jnp.float32), channels, reps)
    beta = beta_ref[...].astype(jnp.float32)                  # (1, lanes)
    o_ref[0] = (xf * scale + beta).astype(o_ref.dtype)


def _grn_scale_kernel(gamma_ref, x_ref, scale_ref, *,
                      channels, reps, rows, tile_rows):
    """Fallback pass 1: accumulate sum(x^2) over spatial tiles; finalize scale.

    Blocks: gamma (1, C); x (1, T, lanes); scale (1, 1, lanes) fp32, resident
    across the tile axis (accumulator pattern).
    """
    t = pl.program_id(1)

    @pl.when(t == 0)
    def _init():
        scale_ref[0] = jnp.zeros_like(scale_ref[0])

    xf = x_ref[0].astype(jnp.float32)                         # (T, lanes)
    sq = xf * xf
    if rows % tile_rows != 0:                                 # static: ragged last tile
        valid = rows - t * tile_rows
        row_id = lax.broadcasted_iota(jnp.int32, sq.shape, 0)
        sq = jnp.where(row_id < valid, sq, 0.0)
    scale_ref[0] += jnp.sum(sq, axis=0, keepdims=True)

    @pl.when(t == pl.num_programs(1) - 1)
    def _finalize():
        scale_ref[0] = _scale_from_sumsq(
            scale_ref[0], gamma_ref[...].astype(jnp.float32), channels, reps)


def _grn_apply_kernel(scale_ref, beta_ref, x_ref, o_ref):
    """Fallback pass 2: out = x * scale + beta (single broadcast FMA per element)."""
    s = scale_ref[0]                                          # (1, lanes) f32
    b = beta_ref[...].astype(jnp.float32)                     # (1, lanes)
    o_ref[0] = (x_ref[0].astype(jnp.float32) * s + b).astype(o_ref.dtype)


# ------------------------------- wrapper ---------------------------------------

def _vmem_capacity_bytes():
    try:
        return int(pltpu.get_tpu_info().vmem_capacity_bytes)
    except Exception:
        return 64 << 20        # conservative: v7x per-core VMEM


def global_response_norm(x, gamma, beta, *, _force_two_pass=False, _tile_rows=None):
    """x: (B, H, W, C); gamma, beta: (1, 1, 1, C). Returns (B, H, W, C)."""
    B, H, W, C = x.shape
    HW = H * W
    itemsize = jnp.dtype(x.dtype).itemsize

    # ---- layout: lane-densify small-C slabs --------------------------------
    lane_dense = (C < 128) and (128 % C == 0) and ((HW * C) % 128 == 0)
    if lane_dense:
        lanes, reps = 128, 128 // C
        rows = (HW * C) // 128
    else:
        lanes, reps = C, 1
        rows = HW

    x2 = x.reshape(B, rows, lanes)                      # free contiguous view
    g2 = gamma.reshape(1, C)
    b2 = beta.reshape(1, C)
    b_lanes = jnp.tile(b2, (1, reps)) if reps > 1 else b2   # (1, lanes), O(C) cost

    vmem_cap = _vmem_capacity_bytes()
    vmem_ceiling = max(vmem_cap - (8 << 20), 32 << 20)  # compiler-scratch headroom

    slab_bytes = rows * lanes * itemsize
    slab_f32 = rows * lanes * 4
    fast_threshold = (24 << 20) if vmem_cap <= (64 << 20) else (48 << 20)
    fast_vmem_need = 4 * slab_bytes + 2 * slab_f32 + (4 << 20)
    use_single_pass = (not _force_two_pass
                       and 4 * slab_bytes <= fast_threshold
                       and fast_vmem_need <= vmem_ceiling)

    # ---- single-pass fast path (2x HBM traffic) ----------------------------
    if use_single_pass:
        vmem_limit = int(min(max(fast_vmem_need, 32 << 20), vmem_ceiling))
        out = pl.pallas_call(
            partial(_grn_fused_kernel, channels=C, reps=reps),
            out_shape=jax.ShapeDtypeStruct((B, rows, lanes), x.dtype),
            grid_spec=pltpu.PrefetchScalarGridSpec(
                num_scalar_prefetch=0,
                grid=(B,),
                in_specs=[
                    pl.BlockSpec((1, C), lambda b: (0, 0)),               # gamma
                    pl.BlockSpec((1, lanes), lambda b: (0, 0)),           # beta (lane-tiled)
                    pl.BlockSpec((1, rows, lanes), lambda b: (b, 0, 0)),  # x slab
                ],
                out_specs=pl.BlockSpec((1, rows, lanes), lambda b: (b, 0, 0)),
            ),
            compiler_params=pltpu.CompilerParams(
                dimension_semantics=("parallel",),
                vmem_limit_bytes=vmem_limit,
            ),
            cost_estimate=pl.CostEstimate(
                flops=4 * B * rows * lanes,
                transcendentals=2 * B * C,
                bytes_accessed=2 * B * rows * lanes * itemsize + 2 * C * 4,
            ),
        )(g2, b_lanes, x2)
        return out.reshape(B, H, W, C)

    # ---- two-pass fallback (slab too big for VMEM) -------------------------
    target_tile = min(8 << 20, (vmem_ceiling - (4 << 20)) // 8)
    bytes_per_row = lanes * itemsize
    T = max(8, (int(target_tile // bytes_per_row) // 8) * 8)
    if T >= rows:
        T = rows
    if _tile_rows is not None:                       # test hook
        T = min(_tile_rows, rows)
    n_t = pl.cdiv(rows, T)
    two_pass_need = 4 * T * lanes * itemsize + 2 * T * lanes * 4 + (4 << 20)
    vmem_limit = int(min(max(two_pass_need, 32 << 20), vmem_ceiling))

    # Pass 1: per-(batch, lane) accumulate, finalize to scale = gamma*Nx + 1.
    # TODO(synk): for B == 1 on v7x (2 TensorCores) a second parallel grid axis
    # over spatial halves (+ tiny combine) would keep both cores busy here.
    scale = pl.pallas_call(
        partial(_grn_scale_kernel, channels=C, reps=reps, rows=rows, tile_rows=T),
        out_shape=jax.ShapeDtypeStruct((B, 1, lanes), jnp.float32),
        grid_spec=pltpu.PrefetchScalarGridSpec(
            num_scalar_prefetch=0,
            grid=(B, n_t),
            in_specs=[
                pl.BlockSpec((1, C), lambda b, t: (0, 0)),            # gamma
                pl.BlockSpec((1, T, lanes), lambda b, t: (b, t, 0)),  # x tile
            ],
            out_specs=pl.BlockSpec((1, 1, lanes), lambda b, t: (b, 0, 0)),
        ),
        compiler_params=pltpu.CompilerParams(
            dimension_semantics=("parallel", "arbitrary"),
            vmem_limit_bytes=vmem_limit,
        ),
        cost_estimate=pl.CostEstimate(
            flops=2 * B * rows * lanes,
            transcendentals=2 * B * C,
            bytes_accessed=B * rows * lanes * itemsize + B * lanes * 4 + C * 4,
        ),
    )(g2, x2)

    # Pass 2: out = x * scale + beta.
    out = pl.pallas_call(
        _grn_apply_kernel,
        out_shape=jax.ShapeDtypeStruct((B, rows, lanes), x.dtype),
        grid_spec=pltpu.PrefetchScalarGridSpec(
            num_scalar_prefetch=0,
            grid=(B, n_t),
            in_specs=[
                pl.BlockSpec((1, 1, lanes), lambda b, t: (b, 0, 0)),  # scale
                pl.BlockSpec((1, lanes), lambda b, t: (0, 0)),        # beta (lane-tiled)
                pl.BlockSpec((1, T, lanes), lambda b, t: (b, t, 0)),  # x tile
            ],
            out_specs=pl.BlockSpec((1, T, lanes), lambda b, t: (b, t, 0)),
        ),
        compiler_params=pltpu.CompilerParams(
            dimension_semantics=("parallel", "parallel"),
            vmem_limit_bytes=vmem_limit,
        ),
        cost_estimate=pl.CostEstimate(
            flops=2 * B * rows * lanes,
            transcendentals=0,
            bytes_accessed=2 * B * rows * lanes * itemsize + B * lanes * 4 + lanes * 4,
        ),
    )(scale, b_lanes, x2)

    return out.reshape(B, H, W, C)


# ------------------------------- reference -------------------------------------

def _reference(x, gamma, beta):
    xf = x.astype(jnp.float32)
    gx = jnp.sqrt(jnp.sum(xf * xf, axis=(1, 2), keepdims=True))      # (B,1,1,C)
    nx = gx / (jnp.mean(gx, axis=-1, keepdims=True) + 1e-6)          # (B,1,1,C)
    return (gamma * (xf * nx) + beta + xf).astype(x.dtype)


if __name__ == "__main__":
    B, H, W, C = 2, 16, 16, 32

    key = jax.random.PRNGKey(0)
    kx, kg, kb = jax.random.split(key, 3)
    x = jax.random.normal(kx, (B, H, W, C), dtype=jnp.float32)
    # Module __init__ uses zeros; use small deterministic non-zero params so
    # the kernel math is actually exercised (shapes match nn.Parameter shapes).
    gamma = 0.1 * jax.random.normal(kg, (1, 1, 1, C), dtype=jnp.float32)
    beta = 0.1 * jax.random.normal(kb, (1, 1, 1, C), dtype=jnp.float32)

    y_ref = _reference(x, gamma, beta)

    # Fast single-pass path (the one taken for this shape on every generation).
    y = jax.block_until_ready(global_response_norm(x, gamma, beta))
    assert y.shape == (B, H, W, C)
    assert jnp.allclose(y, y_ref, atol=1e-5, rtol=1e-5), "fast-path mismatch"

    # Also exercise the two-pass fallback with a ragged tile (64 rows, T=24)
    # so the masked-reduce path is validated as well.
    y2 = jax.block_until_ready(
        global_response_norm(x, gamma, beta, _force_two_pass=True, _tile_rows=24))
    assert jnp.allclose(y2, y_ref, atol=1e-5, rtol=1e-5), "fallback mismatch"

    print("KERNEL_OK")
</pallas_src>

<mosaic_0001>
module attributes {stable_mosaic.version = 11 : i64} {
  func.func @_grn_fused_kernel(%arg0: i32, %arg1: memref<1x32xf32, #tpu.memory_space<vmem>>, %arg2: memref<1x128xf32, #tpu.memory_space<vmem>>, %arg3: memref<1x64x128xf32, #tpu.memory_space<vmem>>, %arg4: memref<1x64x128xf32, #tpu.memory_space<vmem>>) attributes {dimension_semantics = [#tpu.dimension_semantics<parallel>], iteration_bounds = array<i64: 2>, scalar_prefetch = 0 : i64, scratch_operands = 0 : i64, tpu.core_type = #tpu.core_type<tc>, window_params = [{pipeline_mode = #tpu.pipeline_mode<synchronous>, transform_indices = @transform_0, window_bounds = array<i64: 1, 32>}, {pipeline_mode = #tpu.pipeline_mode<synchronous>, transform_indices = @transform_1, window_bounds = array<i64: 1, 128>}, {transform_indices = @transform_2, window_bounds = array<i64: 1, 64, 128>}, {transform_indices = @transform_3, window_bounds = array<i64: 1, 64, 128>}]} {
    %c0 = arith.constant 0 : index
    %c0_0 = arith.constant 0 : index
    %c0_1 = arith.constant 0 : index
    %0 = vector.load %arg3[%c0, %c0_0, %c0_1] : memref<1x64x128xf32, #tpu.memory_space<vmem>>, vector<1x64x128xf32>
    %1 = vector.shape_cast %0 : vector<1x64x128xf32> to vector<64x128xf32>
    %2 = arith.mulf %1, %1 : vector<64x128xf32>
    %cst = arith.constant dense<0.000000e+00> : vector<128xf32>
    %3 = vector.multi_reduction <add>, %2, %cst [0] : vector<64x128xf32> to vector<128xf32>
    %4 = vector.shape_cast %3 : vector<128xf32> to vector<1x128xf32>
    %c0_2 = arith.constant 0 : index
    %c0_3 = arith.constant 0 : index
    %5 = vector.load %arg1[%c0_2, %c0_3] : memref<1x32xf32, #tpu.memory_space<vmem>>, vector<1x32xf32>
    %6 = vector.extract_strided_slice %4 {offsets = [0, 0], sizes = [1, 32], strides = [1, 1]} : vector<1x128xf32> to vector<1x32xf32>
    %7 = vector.extract_strided_slice %4 {offsets = [0, 32], sizes = [1, 32], strides = [1, 1]} : vector<1x128xf32> to vector<1x32xf32>
    %8 = arith.addf %6, %7 : vector<1x32xf32>
    %9 = vector.extract_strided_slice %4 {offsets = [0, 64], sizes = [1, 32], strides = [1, 1]} : vector<1x128xf32> to vector<1x32xf32>
    %10 = arith.addf %8, %9 : vector<1x32xf32>
    %11 = vector.extract_strided_slice %4 {offsets = [0, 96], sizes = [1, 32], strides = [1, 1]} : vector<1x128xf32> to vector<1x32xf32>
    %12 = arith.addf %10, %11 : vector<1x32xf32>
    %13 = math.sqrt %12 : vector<1x32xf32>
    %cst_4 = arith.constant dense<0.000000e+00> : vector<1xf32>
    %14 = vector.multi_reduction <add>, %13, %cst_4 [1] : vector<1x32xf32> to vector<1xf32>
    %15 = vector.shape_cast %14 : vector<1xf32> to vector<1x1xf32>
    %cst_5 = arith.constant 3.200000e+01 : f32
    %16 = vector.broadcast %cst_5 : f32 to vector<1x1xf32>
    %17 = arith.divf %15, %16 : vector<1x1xf32>
    %cst_6 = arith.constant 9.99999997E-7 : f32
    %18 = vector.broadcast %cst_6 : f32 to vector<1x1xf32>
    %19 = arith.addf %17, %18 : vector<1x1xf32>
    %20 = tpu.reciprocal %19 : vector<1x1xf32> -> vector<1x1xf32>
    %21 = vector.broadcast %20 : vector<1x1xf32> to vector<1x32xf32>
    %22 = arith.mulf %13, %21 : vector<1x32xf32>
    %23 = arith.mulf %5, %22 : vector<1x32xf32>
    %cst_7 = arith.constant 1.000000e+00 : f32
    %24 = vector.broadcast %cst_7 : f32 to vector<1x32xf32>
    %25 = arith.addf %23, %24 : vector<1x32xf32>
    %26 = tpu.concatenate %25, %25, %25, %25 in 1 : vector<1x32xf32>, vector<1x32xf32>, vector<1x32xf32>, vector<1x32xf32> -> vector<1x128xf32>
    %c0_8 = arith.constant 0 : index
    %c0_9 = arith.constant 0 : index
    %27 = vector.load %arg2[%c0_8, %c0_9] : memref<1x128xf32, #tpu.memory_space<vmem>>, vector<1x128xf32>
    %28 = vector.broadcast %26 : vector<1x128xf32> to vector<64x128xf32>
    %29 = arith.mulf %1, %28 : vector<64x128xf32>
    %30 = vector.broadcast %27 : vector<1x128xf32> to vector<64x128xf32>
    %31 = arith.addf %29, %30 : vector<64x128xf32>
    %c0_10 = arith.constant 0 : index
    %c0_11 = arith.constant 0 : index
    %c0_12 = arith.constant 0 : index
    %32 = vector.load %arg4[%c0_10, %c0_11, %c0_12] : memref<1x64x128xf32, #tpu.memory_space<vmem>>, vector<1x64x128xf32>
    %33 = vector.shape_cast %32 : vector<1x64x128xf32> to vector<64x128xf32>
    %34 = vector.shape_cast %31 : vector<64x128xf32> to vector<1x64x128xf32>
    tpu.vector_store %arg4[%c0_10, %c0_11, %c0_12], %34 {strides = array<i32>} : memref<1x64x128xf32, #tpu.memory_space<vmem>>, vector<1x64x128xf32>,
    return
  }
  func.func @transform_0(%arg0: i32) -> (i32, i32) {
    %c0_i32 = arith.constant 0 : i32
    %c0_i32_0 = arith.constant 0 : i32
    %c0_i32_1 = arith.constant 0 : i32
    return %c0_i32, %c0_i32_0 : i32, i32
  }
  func.func @transform_1(%arg0: i32) -> (i32, i32) {
    %c0_i32 = arith.constant 0 : i32
    %c0_i32_0 = arith.constant 0 : i32
    %c0_i32_1 = arith.constant 0 : i32
    return %c0_i32, %c0_i32_0 : i32, i32
  }
  func.func @transform_2(%arg0: i32) -> (i32, i32, i32) {
    %c0_i32 = arith.constant 0 : i32
    %c0_i32_0 = arith.constant 0 : i32
    %c0_i32_1 = arith.constant 0 : i32
    return %arg0, %c0_i32, %c0_i32_0 : i32, i32, i32
  }
  func.func @transform_3(%arg0: i32) -> (i32, i32, i32) {
    %c0_i32 = arith.constant 0 : i32
    %c0_i32_0 = arith.constant 0 : i32
    %c0_i32_1 = arith.constant 0 : i32
    return %arg0, %c0_i32, %c0_i32_0 : i32, i32, i32
  }
}

</mosaic_0001>

<llo_original>
// kernel: tpu_custom_call.1
$region0: #{tpu_custom_call.1}
  #allocation0 [shape = 'u32[]', space=smem, size = 0x4, offset = 0x4, fixed_abs, tag = 'smem constant byte address 0x4 - core index']
  #allocation1 [shape = 'u32[144,128]{1,0:T(1,128)}', space=vmem, size = 0x12000, scoped, tag = 'internal scratch']
  %s0 = inlined_call_operand.hbm [shape: f32[1,32], index: 0, kind: input, shape index: {}]
  %s1 = inlined_call_operand.vmem [shape: f32[1,128], index: 1, kind: input, shape index: {}]
  %s2 = inlined_call_operand.hbm [shape: f32[2,64,128], index: 2, kind: input, shape index: {}]
  %s3 = inlined_call_operand.hbm [shape: f32[2,64,128], index: 3, kind: output, shape index: {}]
  %s4 = sld [smem:[#allocation0]]
  $region53: #{tpu_custom_call.1} parent=0
    _
  %s6 = ssub.s32 1, %s4
  %s7 = scalar_select 0, %s6, %s4
  $region1: #{tpu_custom_call.1} parent=0
    #allocation2 [shape = 'u8[512]{0}', space=vmem, size = 0x400, scoped, tag = 'input window, operand 0, single buffered']
    #allocation3 [shape = 's32[2]{0}', space=sflag, size = 0x8, scoped, tag = 'scoped memory for tpu_custom_call.1']
    #allocation4 [shape = 's32[2]{0}', space=sflag, size = 0x8, scoped, tag = 'scoped memory for tpu_custom_call.1']
    #allocation5 [shape = 'u8[65536]{0}', space=vmem, size = 0x10000, scoped, tag = 'input window, operand 2']
    #allocation6 [shape = 's32[2]{0}', space=sflag, size = 0x8, scoped, tag = 'scoped memory for tpu_custom_call.1']
    #allocation7 [shape = 'u8[65536]{0}', space=vmem, size = 0x10000, scoped, tag = 'output window, operand 0']
    %8 = vsyncpa [#allocation3], 0
    %9 = vsyncpa [#allocation6], 0
    %s10 = scalar_lea.sflag [#allocation6], 1
    %11 = vsyncpa %s10, 0
    %12 = vsyncpa [#allocation4], 0
    %s13 = scalar_lea.sflag [#allocation4], 1
    %14 = vsyncpa %s13, 0
    loop: start=0, step=1, limit=4
    $region2: #{tpu_custom_call.1} parent=1 // loop_pre_header
      _
    $region3: #{tpu_custom_call.1} parent=1 // loop_header
      %s16 = sphi 0, %s20
      %p17 = scmp.ge.s32.totalorder %s16, 4
      %s24 = sphi 0, %s24
      %s26 = sphi 0, %s24
      %s27 = sphi 0, %s26
      %s41 = sphi 0, %s27
      %s45 = sphi 0, %s45
      %s47 = sphi 0, %s45
      %s48 = sphi 0, %s47
      %s62 = sphi 0, %s48
      %s68 = sphi 0, %s70
      %s71 = sphi 0, %s68
      %s72 = sphi 0, %s71
      %s88 = sphi 0, %s72
      %s94 = sphi 0, %s96
      %s97 = sphi 0, %s94
      %s98 = sphi 0, %s97
      %s114 = sphi 0, %s98
    $region4: #{tpu_custom_call.1} parent=1 // loop_header_branch
      %19 = sbr.rel (%p17) target = $region8
    $region5: #{tpu_custom_call.1} parent=1 // loop_body
      %s21 = ssub.s32 %s16, 1
      %s22 = ssub.s32 %s16, 2
      %s23 = sadd.s32 %s16, 1
      %s25 = sadd.s32 %s24, 1
      %p28 = scmp.eq.s32.totalorder %s16, 1
      %p29 = scmp.ne.s32.totalorder %s24, %s26
      %p30 = scmp.eq.s32.totalorder %s16, 0
      %p31 = por %p29, %p30
      %p32 = scmp.ne.s32.totalorder %s24, %s26
      %p33 = scmp.eq.s32.totalorder %s21, 1
      %p34 = por %p32, %p33
      %p35 = scmp.ne.s32.totalorder %s26, %s27
      %p36 = scmp.eq.s32.totalorder %s21, 0
      %p37 = por %p35, %p36
      %p38 = scmp.ne.s32.totalorder %s26, %s27
      %p39 = scmp.eq.s32.totalorder %s22, 1
      %p40 = por %p38, %p39
      %p42 = scmp.ne.s32.totalorder %s27, %s41
      %p43 = scmp.eq.s32.totalorder %s22, 0
      %p44 = por %p42, %p43
      %s46 = sadd.s32 %s45, 1
      %p49 = scmp.eq.s32.totalorder %s16, 1
      %p50 = scmp.ne.s32.totalorder %s45, %s47
      %p51 = scmp.eq.s32.totalorder %s16, 0
      %p52 = por %p50, %p51
      %p53 = scmp.ne.s32.totalorder %s45, %s47
      %p54 = scmp.eq.s32.totalorder %s21, 1
      %p55 = por %p53, %p54
      %p56 = scmp.ne.s32.totalorder %s47, %s48
      %p57 = scmp.eq.s32.totalorder %s21, 0
      %p58 = por %p56, %p57
      %p59 = scmp.ne.s32.totalorder %s47, %s48
      %p60 = scmp.eq.s32.totalorder %s22, 1
      %p61 = por %p59, %p60
      %p63 = scmp.ne.s32.totalorder %s48, %s62
      %p64 = scmp.eq.s32.totalorder %s22, 0
      %p65 = por %p63, %p64
      %s66 = ssub.s32 %s16, %s23
      %p67 = scmp.eq.s32.totalorder %s66, 0
      %s69 = sadd.s32 %s68, 1
      %s70 = scalar_select %p67, %s68, %s69
      %p73 = pneg %p67
      %p74 = scmp.eq.s32.totalorder %s16, 1
      %p75 = por %p73, %p74
      %p76 = scmp.ne.s32.totalorder %s68, %s71
      %p77 = scmp.eq.s32.totalorder %s16, 0
      %p78 = por %p76, %p77
      %p79 = scmp.ne.s32.totalorder %s68, %s71
      %p80 = scmp.eq.s32.totalorder %s21, 1
      %p81 = por %p79, %p80
      %p82 = scmp.ne.s32.totalorder %s71, %s72
      %p83 = scmp.eq.s32.totalorder %s21, 0
      %p84 = por %p82, %p83
      %p85 = scmp.ne.s32.totalorder %s71, %s72
      %p86 = scmp.eq.s32.totalorder %s22, 1
      %p87 = por %p85, %p86
      %p89 = scmp.ne.s32.totalorder %s72, %s88
      %p90 = scmp.eq.s32.totalorder %s22, 0
      %p91 = por %p89, %p90
      %s92 = ssub.s32 %s16, %s23
      %p93 = scmp.eq.s32.totalorder %s92, 0
      %s95 = sadd.s32 %s94, 1
      %s96 = scalar_select %p93, %s94, %s95
      %p99 = pneg %p93
      %p100 = scmp.eq.s32.totalorder %s16, 1
      %p101 = por %p99, %p100
      %p102 = scmp.ne.s32.totalorder %s94, %s97
      %p103 = scmp.eq.s32.totalorder %s16, 0
      %p104 = por %p102, %p103
      %p105 = scmp.ne.s32.totalorder %s94, %s97
      %p106 = scmp.eq.s32.totalorder %s21, 1
      %p107 = por %p105, %p106
      %p108 = scmp.ne.s32.totalorder %s97, %s98
      %p109 = scmp.eq.s32.totalorder %s21, 0
      %p110 = por %p108, %p109
      %p111 = scmp.ne.s32.totalorder %s97, %s98
      %p112 = scmp.eq.s32.totalorder %s22, 1
      %p113 = por %p111, %p112
      %p115 = scmp.ne.s32.totalorder %s98, %s114
      %p116 = scmp.eq.s32.totalorder %s22, 0
      %p117 = por %p115, %p116
      %p118 = scmp.le.s32.totalorder 1, %s16
      %p119 = scmp.lt.s32.totalorder %s16, 3
      %p120 = pnand %p118, %p119
      %p121 = pneg %p120
      // Predicated region
      $region9: #{tpu_custom_call.1} parent=5 // pred_check
        _
      $region10: #{tpu_custom_call.1} parent=5 // pred_check_branch
        %123 = sbr.rel (%p120) target = $region12
      $region11: #{tpu_custom_call.1} parent=5 // pred_region
        %s124 = ssub.s32 %s16, 1
        // Predicated region
        $region13: #{tpu_custom_call.1} parent=11 // pred_check
          %p125 = pneg %p37
        $region14: #{tpu_custom_call.1} parent=11 // pred_check_branch
          %127 = sbr.rel (%p125) target = $region16
        $region15: #{tpu_custom_call.1} parent=11 // pred_region
          %s129 = ssub.s32 16, 16
          %130 = vsyncadd [#allocation3], %s129
          %s132 = sshll.u32 [#allocation2], 4
          %s133 = int_to_ptr.vmem [resolvable:$true] %s132
          %135 = dma.hbm_to_vmem [thread:$0]  %s0, 16, %s133, [#allocation3]
        $region16: #{tpu_custom_call.1} parent=11 // pred_fallthru
          _
        // Predicated region
        $region17: #{tpu_custom_call.1} parent=11 // pred_check
          %p136 = pneg %p58
        $region18: #{tpu_custom_call.1} parent=11 // pred_check_branch
          %138 = sbr.rel (%p136) target = $region20
        $region19: #{tpu_custom_call.1} parent=11 // pred_region
          _
        $region20: #{tpu_custom_call.1} parent=11 // pred_fallthru
          _
      $region12: #{tpu_custom_call.1} parent=5 // pred_fallthru
        _
      %p139 = scmp.lt.s32.totalorder %s16, 2
      // Predicated region
      $region21: #{tpu_custom_call.1} parent=5 // pred_check
        %p140 = pneg %p139
      $region22: #{tpu_custom_call.1} parent=5 // pred_check_branch
        %142 = sbr.rel (%p140) target = $region24
      $region23: #{tpu_custom_call.1} parent=5 // pred_region
        // Predicated region
        $region25: #{tpu_custom_call.1} parent=23 // pred_check
          %p143 = pneg %p78
        $region26: #{tpu_custom_call.1} parent=23 // pred_check_branch
          %145 = sbr.rel (%p143) target = $region28
        $region27: #{tpu_custom_call.1} parent=23 // pred_region
          %s146 = sand.u32 %s68, 1
          %s147 = scalar_lea.sflag [#allocation6], %s146
          %s148 = sand.u32 %s68, 1
          %s149 = smul.addr %s148, 64
          %s150 = scalar_lea.vmem [#allocation5], %s149
          %s152 = ssub.s32 1024, 1024
          %153 = vsyncadd %s147, %s152
          %s154 = smul.addr %s16, 8
          %s155 = smul.addr %s154, 128
          %s156 = scalar_lea.hbm %s2, %s155
          %s157 = sshll.u32 %s150, 4
          %s158 = int_to_ptr.vmem [resolvable:$true] %s157
          %163 = dma.hbm_to_vmem [thread:$0]  %s156, 1024, %s158, %s147, 128, 128, 8
        $region28: #{tpu_custom_call.1} parent=23 // pred_fallthru
          _
      $region24: #{tpu_custom_call.1} parent=5 // pred_fallthru
        _
      %p164 = scmp.le.s32.totalorder 1, %s16
      %p165 = scmp.lt.s32.totalorder %s16, 3
      %p166 = pnand %p164, %p165
      %p167 = pneg %p166
      // Predicated region
      $region29: #{tpu_custom_call.1} parent=5 // pred_check
        _
      $region30: #{tpu_custom_call.1} parent=5 // pred_check_branch
        %169 = sbr.rel (%p166) target = $region32
      $region31: #{tpu_custom_call.1} parent=5 // pred_region
        %s170 = ssub.s32 %s16, 1
        // Predicated region
        $region33: #{tpu_custom_call.1} parent=31 // pred_check
          %p171 = pneg %p37
        $region34: #{tpu_custom_call.1} parent=31 // pred_check_branch
          %173 = sbr.rel (%p171) target = $region36
        $region35: #{tpu_custom_call.1} parent=31 // pred_region
          %174 = dma.done [#allocation3], 16
        $region36: #{tpu_custom_call.1} parent=31 // pred_fallthru
          _
        %s175 = sand.u32 %s71, 1
        %s176 = scalar_lea.sflag [#allocation6], %s175
        %s177 = sand.u32 %s71, 1
        %s178 = smul.addr %s177, 64
        %s179 = scalar_lea.vmem [#allocation5], %s178
        // Predicated region
        $region37: #{tpu_custom_call.1} parent=31 // pred_check
          %p180 = pneg %p84
        $region38: #{tpu_custom_call.1} parent=31 // pred_check_branch
          %182 = sbr.rel (%p180) target = $region40
        $region39: #{tpu_custom_call.1} parent=31 // pred_region
          %183 = dma.done %s176, 1024
        $region40: #{tpu_custom_call.1} parent=31 // pred_fallthru
          _
        %p184 = pneg %p37
        %p185 = pneg %p34
        %p186 = pneg %p58
        %p187 = pneg %p55
        %s188 = sand.u32 %s71, 1
        %s189 = scalar_lea.sflag [#allocation6], %s188
        %s190 = sand.u32 %s71, 1
        %s191 = smul.addr %s190, 64
        %s192 = scalar_lea.vmem [#allocation5], %s191
        %p193 = pneg %p84
        %p194 = pneg %p81
        %p195 = pneg %p110
        %p196 = pneg %p107
        %s197 = sand.u32 %s97, 1
        %s198 = scalar_lea.sflag [#allocation4], %s197
        %s199 = sand.u32 %s97, 1
        %s200 = smul.addr %s199, 64
        %s201 = scalar_lea.vmem [#allocation7], %s200
        %v202 = vld [vmem:[%s179] sm:$0xff]
        %v203 = vld [vmem:[%s179 + $0x8] sm:$0xff]
        %v204 = vld [vmem:[%s179 + $0x10] sm:$0xff]
        %v205 = vld [vmem:[%s179 + $0x18] sm:$0xff]
        %v206 = vld [vmem:[%s179 + $0x20] sm:$0xff]
        %v207 = vld [vmem:[%s179 + $0x28] sm:$0xff]
        %v208 = vld [vmem:[%s179 + $0x30] sm:$0xff]
        %v209 = vld [vmem:[%s179 + $0x38] sm:$0xff]
        %v210 = vmul.f32 %v202, %v202
        %v211 = vmul.f32 %v203, %v203
        %v212 = vmul.f32 %v204, %v204
        %v213 = vmul.f32 %v205, %v205
        %v214 = vmul.f32 %v206, %v206
        %v215 = vmul.f32 %v207, %v207
        %v216 = vmul.f32 %v208, %v208
        %v217 = vmul.f32 %v209, %v209
        %v218 = vadd.f32 %v210, %v211
        %v219 = vadd.f32 %v218, %v212
        %v220 = vadd.f32 %v219, %v213
        %v221 = vadd.f32 %v220, %v214
        %v222 = vadd.f32 %v221, %v215
        %v223 = vadd.f32 %v222, %v216
        %v224 = vadd.f32 %v223, %v217
        %v225 = vrot.slane %v224, 4
        %v226 = vadd.f32 %v224, %v225
        %v227 = vrot.slane %v226, 2
        %v228 = vadd.f32 %v226, %v227
        %v229 = vrot.slane %v228, 1
        %v230 = vadd.f32 %v228, %v229
        %v231 = vld [vmem:[#allocation2] sm:$0x1]
        %233 = vrot.lane.b32.xlu0 %v230, 96
        %v234 = vpop.permute.xlu0 %233
        %v236 = vadd.f32 %v230, %v234
        %237 = vrot.lane.b32.xlu0 %v230, 64
        %v238 = vpop.permute.xlu0 %237
        %v240 = vadd.f32 %v236, %v238
        %241 = vrot.lane.b32.xlu0 %v230, 32
        %v242 = vpop.permute.xlu0 %241
        %v244 = vadd.f32 %v240, %v242
        %v245 = vrsqrt.pop %v244
        %v246 = vmul.f32 %v244, %v245
        %vm247 = vcmp.eq.f32.partialorder %v244, inf
        %v248 = vsel %vm247, %v244, %v246
        %vm249 = vcmp.eq.f32.partialorder %v244, 0.0
        %v250 = vand.u32 %v244, 2147483648
        %v251 = vsel %vm249, %v250, %v248
        %vm252 = vcmask 253952
        %v253 = vsel %vm252, %v251, 0.0
        %254 = vadd.xlane.f32.xlu0 %v253
        %v255 = vpop.xlane.xlu0 %254
        %v256 = vrcp.pop 32.0
        %v257 = vmul.f32 %v255, %v256
        %v258 = vadd.f32 %v257, 1e-06
        %v259 = vrcp.pop %v258
        %v260 = vmul.f32 %v251, %v259
        %v261 = vmul.f32 %v231, %v260
        %v262 = vadd.f32 %v261, 1.0
        %v264 = vlaneseq
        %v265 = vshrl.u32 %v264, 7
        %v266 = vsub.s32 0, %v265
        %v267 = vrot.slane %v262, %v266
        %268 = vrot.lane.b32.xlu0 %v267, 32
        %v269 = vpop.permute.xlu0 %268
        %271 = vrot.lane.b32.xlu0 %v267, 64
        %v272 = vpop.permute.xlu0 %271
        %274 = vrot.lane.b32.xlu0 %v267, 96
        %v275 = vpop.permute.xlu0 %274
        %vm277 = vcmask 261120
        %v278 = vsel %vm277, %v262, %v269
        %vm279 = vcmask 523264
        %v280 = vsel %vm279, %v278, %v272
        %vm281 = vcmask 785408
        %v282 = vsel %vm281, %v280, %v275
        %v283 = vld [vmem:[%s1] sm:$0x1]
        %v284 = vlaneseq
        %v285 = vshrl.u32 %v284, 7
        %v286 = vsub.s32 0, %v285
        %v287 = vrot.slane %v282, %v286
        %v288 = vmul.f32 %v202, %v287
        %v289 = vmul.f32 %v203, %v287
        %v290 = vmul.f32 %v204, %v287
        %v291 = vmul.f32 %v205, %v287
        %v292 = vmul.f32 %v206, %v287
        %v293 = vmul.f32 %v207, %v287
        %v294 = vmul.f32 %v208, %v287
        %v295 = vmul.f32 %v209, %v287
        %v297 = vlaneseq
        %v298 = vshrl.u32 %v297, 7
        %v299 = vsub.s32 0, %v298
        %v300 = vrot.slane %v283, %v299
        %v302 = vadd.f32 %v288, %v300
        %v303 = vadd.f32 %v289, %v300
        %v304 = vadd.f32 %v290, %v300
        %v305 = vadd.f32 %v291, %v300
        %v306 = vadd.f32 %v292, %v300
        %v307 = vadd.f32 %v293, %v300
        %v308 = vadd.f32 %v294, %v300
        %v309 = vadd.f32 %v295, %v300
        %310 = vst [vmem:[%s201] sm:$0xff] %v302
        %311 = vst [vmem:[%s201 + $0x8] sm:$0xff] %v303
        %312 = vst [vmem:[%s201 + $0x10] sm:$0xff] %v304
        %313 = vst [vmem:[%s201 + $0x18] sm:$0xff] %v305
        %314 = vst [vmem:[%s201 + $0x20] sm:$0xff] %v306
        %315 = vst [vmem:[%s201 + $0x28] sm:$0xff] %v307
        %316 = vst [vmem:[%s201 + $0x30] sm:$0xff] %v308
        %317 = vst [vmem:[%s201 + $0x38] sm:$0xff] %v309
        %s318 = sand.u32 %s97, 1
        %s319 = scalar_lea.sflag [#allocation4], %s318
        %s320 = sand.u32 %s97, 1
        %s321 = smul.addr %s320, 64
        %s322 = scalar_lea.vmem [#allocation7], %s321
        // Predicated region
        $region41: #{tpu_custom_call.1} parent=31 // pred_check
          %p323 = pneg %p107
        $region42: #{tpu_custom_call.1} parent=31 // pred_check_branch
          %325 = sbr.rel (%p323) target = $region44
        $region43: #{tpu_custom_call.1} parent=31 // pred_region
          %s327 = ssub.s32 1024, 1024
          %328 = vsyncadd %s319, %s327
          %s329 = smul.addr %s21, 8
          %s330 = smul.addr %s329, 128
          %s331 = scalar_lea.hbm %s3, %s330
          %s332 = sshll.u32 %s322, 4
          %s333 = int_to_ptr.vmem [resolvable:$true] %s332
          %338 = dma.vmem_to_hbm [thread:$0]  %s333, 1024, %s331, %s319, 128, 128, 8
        $region44: #{tpu_custom_call.1} parent=31 // pred_fallthru
          _
      $region32: #{tpu_custom_call.1} parent=5 // pred_fallthru
        _
      %p339 = scmp.le.s32.totalorder 2, %s16
      // Predicated region
      $region45: #{tpu_custom_call.1} parent=5 // pred_check
        %p340 = pneg %p339
      $region46: #{tpu_custom_call.1} parent=5 // pred_check_branch
        %342 = sbr.rel (%p340) target = $region48
      $region47: #{tpu_custom_call.1} parent=5 // pred_region
        %s343 = ssub.s32 %s16, 2
        // Predicated region
        $region49: #{tpu_custom_call.1} parent=47 // pred_check
          %p344 = pneg %p113
        $region50: #{tpu_custom_call.1} parent=47 // pred_check_branch
          %346 = sbr.rel (%p344) target = $region52
        $region51: #{tpu_custom_call.1} parent=47 // pred_region
          %s347 = sand.u32 %s98, 1
          %s348 = scalar_lea.sflag [#allocation4], %s347
          %s349 = sand.u32 %s98, 1
          %s350 = smul.addr %s349, 64
          %s351 = scalar_lea.vmem [#allocation7], %s350
          %352 = dma.done %s348, 1024
        $region52: #{tpu_custom_call.1} parent=47 // pred_fallthru
          _
      $region48: #{tpu_custom_call.1} parent=5 // pred_fallthru
        _
    $region6: #{tpu_custom_call.1} parent=1 // loop_footer
      %s20 = sadd.s32 1, %s16
    $region7: #{tpu_custom_call.1} parent=1 // loop_footer_branch
      %15 = sbr.rel target = $region3
    $region8: #{tpu_custom_call.1} parent=1 // loop_exit
      _
    %353 = vsyncpa [#allocation3], 1
    %s354 = scalar_lea.sflag [#allocation3], 1
    %355 = vsyncpa %s354, 1
    %356 = vsyncpa [#allocation6], 1
    %s357 = scalar_lea.sflag [#allocation6], 1
    %358 = vsyncpa %s357, 1
    %359 = vsyncpa [#allocation4], 1
    %s360 = scalar_lea.sflag [#allocation4], 1
    %361 = vsyncpa %s360, 1

</llo_original>
